<compile_context>
chip_gen: v7x
topology: tpu7x:2x2x1
jax: 0.10.0
libtpu: 0.0.40
codegen_flags: <defaults>
</compile_context>

<pallas_src>
import functools

import jax
import jax.numpy as jnp
from jax import lax
from jax.experimental import pallas as pl
from jax.experimental.pallas import tpu as pltpu


def _round_up(n, m):
    return (n + m - 1) // m * m


def pack_actor_critic_params(params, num_inputs, num_outputs, hidden_size,
                             weight_dtype=jnp.float32):
    """Fuse both heads into wide layers and pack everything into 2 slabs.

    packA rows (sections 8-row aligned, lane width 2H):
      [0,         NI)        : W1f = [cw1 | aw1]   (NI, 2H)
      [NIp,       NIp+1)     : b1f = [cb1 | ab1]   (1,  2H)
      [NIp+8,     NIp+8+H)   : W2f = [cw2 | aw2]   (H,  2H)   two (H,H) blocks,
                                                               NO zero block-diagonal
      [NIp+8+Hp,  ...+1)     : b2f = [cb2 | ab2]   (1,  2H)
    packB rows (lane width P = round_up(NO+1, 128)):
      [0,   2H)  : W3f (2H, P): rows [0,H) lane NO = critic, rows [H,2H) lanes [0,NO) = actor
      [H2p, +1)  : b3f (1,  P)

    At production sizes pick H as a multiple of 128 so all lane slices are tile-aligned
    and pass weight_dtype=jnp.bfloat16 on v6e/v7x (f32 accumulation is kept in-kernel).
    """
    NI, NO, H = num_inputs, num_outputs, hidden_size
    H2 = 2 * H
    NIp = _round_up(NI, 8)
    Hp = _round_up(H, 8)
    H2p = _round_up(H2, 8)
    P = _round_up(NO + 1, 128)
    f32 = jnp.float32

    w1 = jnp.concatenate([params["cw1"], params["aw1"]], axis=1)      # (NI, 2H)
    b1 = jnp.concatenate([params["cb1"], params["ab1"]], axis=1)      # (1, 2H)
    w2 = jnp.concatenate([params["cw2"], params["aw2"]], axis=1)      # (H, 2H)
    b2 = jnp.concatenate([params["cb2"], params["ab2"]], axis=1)      # (1, 2H)
    w3 = jnp.zeros((H2, P), f32)
    w3 = w3.at[H:, :NO].set(params["aw3"])
    w3 = w3.at[:H, NO].set(params["cw3"][:, 0])
    b3 = jnp.zeros((1, P), f32)
    b3 = b3.at[0, :NO].set(params["ab3"][0])
    b3 = b3.at[0, NO].set(params["cb3"][0, 0])

    def pad_rows(a, rows):
        return jnp.pad(a, ((0, rows - a.shape[0]), (0, 0)))

    packA = jnp.concatenate(
        [pad_rows(w1, NIp), pad_rows(b1, 8), pad_rows(w2, Hp), pad_rows(b2, 8)],
        axis=0).astype(weight_dtype)
    packB = jnp.concatenate([pad_rows(w3, H2p), pad_rows(b3, 8)],
                            axis=0).astype(weight_dtype)

    return dict(packA=packA, packB=packB, num_inputs=NI, num_outputs=NO,
                hidden=H, out_pad=P)


def _fused_kernel(x_ref, pa_ref, pb_ref, out_ref, *, NI, NO, H, P):
    H2 = 2 * H
    NIp = _round_up(NI, 8)
    Hp = _round_up(H, 8)
    H2p = _round_up(H2, 8)
    off_b1 = NIp
    off_w2 = NIp + 8
    off_b2 = NIp + 8 + Hp
    off_b3 = H2p

    cdt = pa_ref.dtype                        # bf16 -> bf16 MXU feeds, f32 accumulation
    x = x_ref[...].astype(cdt)                # (bt, NI)

    w1 = pa_ref[0:NI, :]                      # (NI, 2H)
    b1 = pa_ref[off_b1:off_b1 + 1, :].astype(jnp.float32)
    w2 = pa_ref[off_w2:off_w2 + H, :]         # (H, 2H) = [cw2 | aw2]
    b2 = pa_ref[off_b2:off_b2 + 1, :].astype(jnp.float32)
    w3 = pb_ref[0:H2, :]                      # (2H, P)
    b3 = pb_ref[off_b3:off_b3 + 1, :].astype(jnp.float32)

    # layer 1: both heads in one wide matmul -> (bt, 2H)
    h = jnp.tanh(jnp.dot(x, w1, preferred_element_type=jnp.float32) + b1)

    # layer 2: two (H,H) dots on the lane halves (no zero block-diagonal waste)
    hc = jnp.tanh(jnp.dot(h[:, :H].astype(cdt), w2[:, :H],
                          preferred_element_type=jnp.float32) + b2[:, :H])
    ha = jnp.tanh(jnp.dot(h[:, H:].astype(cdt), w2[:, H:],
                          preferred_element_type=jnp.float32) + b2[:, H:])

    # layer 3: sum of two half-dots straight into the (bt, P) logits/value slab
    z = (jnp.dot(hc.astype(cdt), w3[:H, :], preferred_element_type=jnp.float32)
         + jnp.dot(ha.astype(cdt), w3[H:, :], preferred_element_type=jnp.float32)
         + b3)

    # numerically-stable softmax over the NO logit lanes (pad lanes masked out)
    col = lax.broadcasted_iota(jnp.int32, z.shape, 1)
    is_logit = col < NO
    masked = jnp.where(is_logit, z, jnp.float32(-1e30))
    m = jnp.max(masked, axis=-1, keepdims=True)
    e = jnp.where(is_logit, jnp.exp(masked - m), 0.0)
    denom = jnp.sum(e, axis=-1, keepdims=True)
    r = pl.reciprocal(denom, approx=True)     # EUP vrcp (off the VPU critical path)
    r = r * (2.0 - denom * r)                 # one Newton-Raphson step -> ~f32 exact
    probs = e * r

    # lane-dense output slab: probs in lanes [0, NO), critic value in lane NO.
    out = jnp.where(is_logit, probs, jnp.where(col == NO, z, 0.0))
    out_ref[...] = out.astype(out_ref.dtype)


def _pick_batch_tile(B):
    """Batch tile: multiple of 8 (or full B); prefer large tiles but >= 2 grid steps."""
    if B <= 8 or B % 8 != 0:
        return B                               # tiny / ragged batch: one full tile
    for bt in (1024, 512, 256):                # large lane-dense tiles amortize per-step cost
        if B % bt == 0 and B // bt >= 2:
            return bt
    if B % 16 == 0:                            # split in two -> v7x's 2 TCs both get work
        return B // 2
    return B


def actor_critic_forward(x, packed):
    """Returns (probs, value) — probs parameterizes the Categorical distribution."""
    NI, NO = packed["num_inputs"], packed["num_outputs"]
    H, P = packed["hidden"], packed["out_pad"]
    packA, packB = packed["packA"], packed["packB"]
    B = x.shape[0]
    H2 = 2 * H

    bt = _pick_batch_tile(B)
    grid = (B // bt,)

    kernel = functools.partial(_fused_kernel, NI=NI, NO=NO, H=H, P=P)

    # advisory cost hint for XLA's scheduler
    flops = 2 * B * (NI * H2 + 2 * H * H + H2 * P)
    transcendentals = B * (2 * H2 + NO)                 # tanh (x2 layers) + exp
    w_bytes = int(packA.size * packA.dtype.itemsize + packB.size * packB.dtype.itemsize)
    bytes_accessed = int(4 * (x.size + B * P) + w_bytes)

    # weight slabs never change across the grid -> keep a single VMEM copy
    def _resident_spec(shape):
        if hasattr(pl, "Buffered"):
            try:
                return pl.BlockSpec(shape, lambda i: (0, 0),
                                    pipeline_mode=pl.Buffered(1))
            except TypeError:
                pass
        return pl.BlockSpec(shape, lambda i: (0, 0))

    # explicit VMEM budget: 2x (input, output) tiles + weight slabs, with headroom
    vmem_needed = 2 * bt * NI * 4 + 2 * bt * P * 4 + 2 * w_bytes
    vmem_limit = int(min(max(2 * vmem_needed + (2 << 20), 16 << 20), 64 << 20))

    slab = pl.pallas_call(
        kernel,
        out_shape=jax.ShapeDtypeStruct((B, P), jnp.float32),
        grid=grid,
        in_specs=[
            pl.BlockSpec((bt, NI), lambda i: (i, 0)),
            _resident_spec(packA.shape),
            _resident_spec(packB.shape),
        ],
        out_specs=pl.BlockSpec((bt, P), lambda i: (i, 0)),
        compiler_params=pltpu.CompilerParams(
            dimension_semantics=("parallel",),
            vmem_limit_bytes=vmem_limit),
        cost_estimate=pl.CostEstimate(flops=flops, transcendentals=transcendentals,
                                      bytes_accessed=bytes_accessed),
    )(x, packA, packB)

    probs = slab[:, :NO]
    value = slab[:, NO:NO + 1]
    return probs, value


def init_params(key, num_inputs, num_outputs, hidden_size):
    """Deterministic synthetic init (PyTorch shapes, stored transposed as [in, out])."""
    ks = jax.random.split(key, 12)

    def lin(kw, kb, fan_in, fan_out):
        bound = 1.0 / jnp.sqrt(fan_in)
        w = jax.random.uniform(kw, (fan_in, fan_out), jnp.float32, -bound, bound)
        b = jax.random.uniform(kb, (1, fan_out), jnp.float32, -bound, bound)
        return w, b

    cw1, cb1 = lin(ks[0], ks[1], num_inputs, hidden_size)
    cw2, cb2 = lin(ks[2], ks[3], hidden_size, hidden_size)
    cw3, cb3 = lin(ks[4], ks[5], hidden_size, 1)
    aw1, ab1 = lin(ks[6], ks[7], num_inputs, hidden_size)
    aw2, ab2 = lin(ks[8], ks[9], hidden_size, hidden_size)
    aw3, ab3 = lin(ks[10], ks[11], hidden_size, num_outputs)
    return dict(cw1=cw1, cb1=cb1, cw2=cw2, cb2=cb2, cw3=cw3, cb3=cb3,
                aw1=aw1, ab1=ab1, aw2=aw2, ab2=ab2, aw3=aw3, ab3=ab3)


def reference_forward(x, p):
    h = jnp.tanh(x @ p["cw1"] + p["cb1"])
    h = jnp.tanh(h @ p["cw2"] + p["cb2"])
    value = h @ p["cw3"] + p["cb3"]
    a = jnp.tanh(x @ p["aw1"] + p["ab1"])
    a = jnp.tanh(a @ p["aw2"] + p["ab2"])
    logits = a @ p["aw3"] + p["ab3"]
    probs = jax.nn.softmax(logits, axis=-1)
    return probs, value


if __name__ == "__main__":
    B, NUM_INPUTS, NUM_OUTPUTS, HIDDEN = 8, 32, 8, 32

    key = jax.random.PRNGKey(0)
    kx, kp = jax.random.split(key)
    x = jax.random.normal(kx, (B, NUM_INPUTS), dtype=jnp.float32)
    params = init_params(kp, NUM_INPUTS, NUM_OUTPUTS, HIDDEN)
    # TODO(synk): at production sizes pass weight_dtype=jnp.bfloat16 (v6e/v7x MXU rate,
    #             half the weight bytes); kept f32 here to preserve the 1e-5 tolerance.
    packed = pack_actor_critic_params(params, NUM_INPUTS, NUM_OUTPUTS, HIDDEN)

    probs, value = actor_critic_forward(x, packed)
    jax.block_until_ready((probs, value))

    probs_ref, value_ref = reference_forward(x, params)
    assert probs.shape == (B, NUM_OUTPUTS) and value.shape == (B, 1)
    assert jnp.allclose(probs, probs_ref, atol=1e-5, rtol=1e-5)
    assert jnp.allclose(value, value_ref, atol=1e-5, rtol=1e-5)
    assert jnp.allclose(jnp.sum(probs, axis=-1), 1.0, atol=1e-5)

    print("KERNEL_OK")
</pallas_src>

<mosaic_0001>
module attributes {stable_mosaic.version = 11 : i64} {
  func.func @_fused_kernel(%arg0: i32, %arg1: memref<8x32xf32, #tpu.memory_space<vmem>>, %arg2: memref<80x64xf32, #tpu.memory_space<vmem>>, %arg3: memref<72x128xf32, #tpu.memory_space<vmem>>, %arg4: memref<8x128xf32, #tpu.memory_space<vmem>>) attributes {dimension_semantics = [#tpu.dimension_semantics<parallel>], iteration_bounds = array<i64: 1>, scalar_prefetch = 0 : i64, scratch_operands = 0 : i64, tpu.core_type = #tpu.core_type<tc>, window_params = [{transform_indices = @transform_0, window_bounds = array<i64: 8, 32>}, {pipeline_mode = #tpu.pipeline_mode<synchronous>, transform_indices = @transform_1, window_bounds = array<i64: 80, 64>}, {pipeline_mode = #tpu.pipeline_mode<synchronous>, transform_indices = @transform_2, window_bounds = array<i64: 72, 128>}, {transform_indices = @transform_3, window_bounds = array<i64: 8, 128>}]} {
    %c0 = arith.constant 0 : index
    %c0_0 = arith.constant 0 : index
    %0 = vector.load %arg1[%c0, %c0_0] : memref<8x32xf32, #tpu.memory_space<vmem>>, vector<8x32xf32>
    %c0_1 = arith.constant 0 : index
    %c0_2 = arith.constant 0 : index
    %1 = vector.load %arg2[%c0_1, %c0_2] : memref<80x64xf32, #tpu.memory_space<vmem>>, vector<32x64xf32>
    %c32 = arith.constant 32 : index
    %c0_3 = arith.constant 0 : index
    %2 = vector.load %arg2[%c32, %c0_3] : memref<80x64xf32, #tpu.memory_space<vmem>>, vector<1x64xf32>
    %c40 = arith.constant 40 : index
    %c0_4 = arith.constant 0 : index
    %3 = vector.load %arg2[%c40, %c0_4] : memref<80x64xf32, #tpu.memory_space<vmem>>, vector<32x64xf32>
    %c72 = arith.constant 72 : index
    %c0_5 = arith.constant 0 : index
    %4 = vector.load %arg2[%c72, %c0_5] : memref<80x64xf32, #tpu.memory_space<vmem>>, vector<1x64xf32>
    %c0_6 = arith.constant 0 : index
    %c0_7 = arith.constant 0 : index
    %5 = vector.load %arg3[%c0_6, %c0_7] : memref<72x128xf32, #tpu.memory_space<vmem>>, vector<64x128xf32>
    %c64 = arith.constant 64 : index
    %c0_8 = arith.constant 0 : index
    %6 = vector.load %arg3[%c64, %c0_8] : memref<72x128xf32, #tpu.memory_space<vmem>>, vector<1x128xf32>
    %cst = arith.constant dense<0.000000e+00> : vector<8x64xf32>
    %7 = tpu.matmul %0, %1, %cst {dimension_numbers = #tpu.dot_dimension_numbers<[1], [0], [0], [1], [0, 0, 1, 1], [], []>} : vector<8x32xf32>, vector<32x64xf32>, vector<8x64xf32> -> vector<8x64xf32>
    %8 = vector.broadcast %2 : vector<1x64xf32> to vector<8x64xf32>
    %9 = arith.addf %7, %8 : vector<8x64xf32>
    %10 = math.tanh %9 : vector<8x64xf32>
    %11 = vector.extract_strided_slice %10 {offsets = [0, 0], sizes = [8, 32], strides = [1, 1]} : vector<8x64xf32> to vector<8x32xf32>
    %12 = vector.extract_strided_slice %3 {offsets = [0, 0], sizes = [32, 32], strides = [1, 1]} : vector<32x64xf32> to vector<32x32xf32>
    %cst_9 = arith.constant dense<0.000000e+00> : vector<8x32xf32>
    %13 = tpu.matmul %11, %12, %cst_9 {dimension_numbers = #tpu.dot_dimension_numbers<[1], [0], [0], [1], [0, 0, 1, 1], [], []>} : vector<8x32xf32>, vector<32x32xf32>, vector<8x32xf32> -> vector<8x32xf32>
    %14 = vector.extract_strided_slice %4 {offsets = [0, 0], sizes = [1, 32], strides = [1, 1]} : vector<1x64xf32> to vector<1x32xf32>
    %15 = vector.broadcast %14 : vector<1x32xf32> to vector<8x32xf32>
    %16 = arith.addf %13, %15 : vector<8x32xf32>
    %17 = math.tanh %16 : vector<8x32xf32>
    %18 = vector.extract_strided_slice %10 {offsets = [0, 32], sizes = [8, 32], strides = [1, 1]} : vector<8x64xf32> to vector<8x32xf32>
    %19 = vector.extract_strided_slice %3 {offsets = [0, 32], sizes = [32, 32], strides = [1, 1]} : vector<32x64xf32> to vector<32x32xf32>
    %cst_10 = arith.constant dense<0.000000e+00> : vector<8x32xf32>
    %20 = tpu.matmul %18, %19, %cst_10 {dimension_numbers = #tpu.dot_dimension_numbers<[1], [0], [0], [1], [0, 0, 1, 1], [], []>} : vector<8x32xf32>, vector<32x32xf32>, vector<8x32xf32> -> vector<8x32xf32>
    %21 = vector.extract_strided_slice %4 {offsets = [0, 32], sizes = [1, 32], strides = [1, 1]} : vector<1x64xf32> to vector<1x32xf32>
    %22 = vector.broadcast %21 : vector<1x32xf32> to vector<8x32xf32>
    %23 = arith.addf %20, %22 : vector<8x32xf32>
    %24 = math.tanh %23 : vector<8x32xf32>
    %25 = vector.extract_strided_slice %5 {offsets = [0, 0], sizes = [32, 128], strides = [1, 1]} : vector<64x128xf32> to vector<32x128xf32>
    %cst_11 = arith.constant dense<0.000000e+00> : vector<8x128xf32>
    %26 = tpu.matmul %17, %25, %cst_11 {dimension_numbers = #tpu.dot_dimension_numbers<[1], [0], [0], [1], [0, 0, 1, 1], [], []>} : vector<8x32xf32>, vector<32x128xf32>, vector<8x128xf32> -> vector<8x128xf32>
    %27 = vector.extract_strided_slice %5 {offsets = [32, 0], sizes = [32, 128], strides = [1, 1]} : vector<64x128xf32> to vector<32x128xf32>
    %cst_12 = arith.constant dense<0.000000e+00> : vector<8x128xf32>
    %28 = tpu.matmul %24, %27, %cst_12 {dimension_numbers = #tpu.dot_dimension_numbers<[1], [0], [0], [1], [0, 0, 1, 1], [], []>} : vector<8x32xf32>, vector<32x128xf32>, vector<8x128xf32> -> vector<8x128xf32>
    %29 = arith.addf %26, %28 : vector<8x128xf32>
    %30 = vector.broadcast %6 : vector<1x128xf32> to vector<8x128xf32>
    %31 = arith.addf %29, %30 : vector<8x128xf32>
    %32 = tpu.iota {dimensions = array<i32: 1>} : vector<8x128xi32>
    %c8_i32 = arith.constant 8 : i32
    %33 = vector.broadcast %c8_i32 : i32 to vector<8x128xi32>
    %34 = arith.cmpi slt, %32, %33 : vector<8x128xi32>
    %cst_13 = arith.constant -1.000000e+30 : f32
    %35 = vector.broadcast %cst_13 : f32 to vector<8x128xf32>
    %36 = arith.select %34, %31, %35 : vector<8x128xi1>, vector<8x128xf32>
    %cst_14 = arith.constant dense<0xFF800000> : vector<8xf32>
    %37 = vector.multi_reduction <maximumf>, %36, %cst_14 [1] : vector<8x128xf32> to vector<8xf32>
    %38 = vector.shape_cast %37 : vector<8xf32> to vector<8x1xf32>
    %39 = vector.broadcast %38 : vector<8x1xf32> to vector<8x128xf32>
    %40 = arith.subf %36, %39 : vector<8x128xf32>
    %41 = math.exp %40 : vector<8x128xf32>
    %cst_15 = arith.constant 0.000000e+00 : f32
    %42 = vector.broadcast %cst_15 : f32 to vector<8x128xf32>
    %43 = arith.select %34, %41, %42 : vector<8x128xi1>, vector<8x128xf32>
    %cst_16 = arith.constant dense<0.000000e+00> : vector<8xf32>
    %44 = vector.multi_reduction <add>, %43, %cst_16 [1] : vector<8x128xf32> to vector<8xf32>
    %45 = vector.shape_cast %44 : vector<8xf32> to vector<8x1xf32>
    %46 = tpu.reciprocal %45 {approx = true} : vector<8x1xf32> -> vector<8x1xf32>
    %47 = arith.mulf %45, %46 : vector<8x1xf32>
    %cst_17 = arith.constant 2.000000e+00 : f32
    %48 = vector.broadcast %cst_17 : f32 to vector<8x1xf32>
    %49 = arith.subf %48, %47 : vector<8x1xf32>
    %50 = arith.mulf %46, %49 : vector<8x1xf32>
    %51 = vector.broadcast %50 : vector<8x1xf32> to vector<8x128xf32>
    %52 = arith.mulf %43, %51 : vector<8x128xf32>
    %c8_i32_18 = arith.constant 8 : i32
    %53 = vector.broadcast %c8_i32_18 : i32 to vector<8x128xi32>
    %54 = arith.cmpi eq, %32, %53 : vector<8x128xi32>
    %cst_19 = arith.constant 0.000000e+00 : f32
    %55 = vector.broadcast %cst_19 : f32 to vector<8x128xf32>
    %56 = arith.select %54, %31, %55 : vector<8x128xi1>, vector<8x128xf32>
    %57 = arith.select %34, %52, %56 : vector<8x128xi1>, vector<8x128xf32>
    %c0_20 = arith.constant 0 : index
    %c0_21 = arith.constant 0 : index
    %58 = vector.load %arg4[%c0_20, %c0_21] : memref<8x128xf32, #tpu.memory_space<vmem>>, vector<8x128xf32>
    tpu.vector_store %arg4[%c0_20, %c0_21], %57 {strides = array<i32>} : memref<8x128xf32, #tpu.memory_space<vmem>>, vector<8x128xf32>,
    return
  }
  func.func @transform_0(%arg0: i32) -> (i32, i32) {
    %c0_i32 = arith.constant 0 : i32
    %c0_i32_0 = arith.constant 0 : i32
    return %arg0, %c0_i32 : i32, i32
  }
  func.func @transform_1(%arg0: i32) -> (i32, i32) {
    %c0_i32 = arith.constant 0 : i32
    %c0_i32_0 = arith.constant 0 : i32
    %c0_i32_1 = arith.constant 0 : i32
    return %c0_i32, %c0_i32_0 : i32, i32
  }
  func.func @transform_2(%arg0: i32) -> (i32, i32) {
    %c0_i32 = arith.constant 0 : i32
    %c0_i32_0 = arith.constant 0 : i32
    %c0_i32_1 = arith.constant 0 : i32
    return %c0_i32, %c0_i32_0 : i32, i32
  }
  func.func @transform_3(%arg0: i32) -> (i32, i32) {
    %c0_i32 = arith.constant 0 : i32
    %c0_i32_0 = arith.constant 0 : i32
    return %arg0, %c0_i32 : i32, i32
  }
}

</mosaic_0001>

<llo_original>
// kernel: tpu_custom_call.1
$region0: #{tpu_custom_call.1}
  #allocation0 [shape = 'u32[]', space=smem, size = 0x4, offset = 0x4, fixed_abs, tag = 'smem constant byte address 0x4 - core index']
  #allocation1 [shape = 'u32[144,128]{1,0:T(1,128)}', space=vmem, size = 0x12000, scoped, tag = 'internal scratch']
  %s0 = inlined_call_operand.vmem [shape: f32[8,32], index: 0, kind: input, shape index: {}]
  %s1 = inlined_call_operand.vmem [shape: f32[80,64], index: 1, kind: input, shape index: {}]
  %s2 = inlined_call_operand.vmem [shape: f32[72,128], index: 2, kind: input, shape index: {}]
  %s3 = inlined_call_operand.hbm [shape: f32[8,128], index: 3, kind: output, shape index: {}]
  %s4 = sld [smem:[#allocation0]]
  $region22: #{tpu_custom_call.1} parent=0
    _
  %s6 = ssub.s32 1, %s4
  %s7 = scalar_select 0, %s6, %s4
  $region1: #{tpu_custom_call.1} parent=0
    #allocation2 [shape = 'u8[4096]{0}', space=vmem, size = 0x1000, scoped, tag = 'output window, operand 0, single buffered']
    #allocation3 [shape = 's32[1]{0}', space=sflag, size = 0x4, scoped, tag = 'scoped memory for tpu_custom_call.1']
    %8 = vsyncpa [#allocation3], 0
    // Predicated region
    $region2: #{tpu_custom_call.1} parent=1 // pred_check
      _
    $region3: #{tpu_custom_call.1} parent=1 // pred_check_branch
      %10 = sbr.rel (0) target = $region5
    $region4: #{tpu_custom_call.1} parent=1 // pred_region
      _
    $region5: #{tpu_custom_call.1} parent=1 // pred_fallthru
      _
    // Predicated region
    $region6: #{tpu_custom_call.1} parent=1 // pred_check
      _
    $region7: #{tpu_custom_call.1} parent=1 // pred_check_branch
      %12 = sbr.rel (0) target = $region9
    $region8: #{tpu_custom_call.1} parent=1 // pred_region
      _
    $region9: #{tpu_custom_call.1} parent=1 // pred_fallthru
      _
    // Predicated region
    $region10: #{tpu_custom_call.1} parent=1 // pred_check
      _
    $region11: #{tpu_custom_call.1} parent=1 // pred_check_branch
      %14 = sbr.rel (0) target = $region13
    $region12: #{tpu_custom_call.1} parent=1 // pred_region
      _
    $region13: #{tpu_custom_call.1} parent=1 // pred_fallthru
      _
    %v15 = vld [vmem:[%s0] sm:$0xff]
    %v16 = vld [vmem:[%s1] sm:$0xff]
    %v17 = vld [vmem:[%s1 + $0x8] sm:$0xff]
    %v18 = vld [vmem:[%s1 + $0x10] sm:$0xff]
    %v19 = vld [vmem:[%s1 + $0x18] sm:$0xff]
    %v20 = vld [vmem:[%s1 + $0x20] sm:$0x1]
    %v21 = vld [vmem:[%s1 + $0x28] sm:$0xff]
    %v22 = vld [vmem:[%s1 + $0x30] sm:$0xff]
    %v23 = vld [vmem:[%s1 + $0x38] sm:$0xff]
    %v24 = vld [vmem:[%s1 + $0x40] sm:$0xff]
    %v25 = vld [vmem:[%s1 + $0x48] sm:$0x1]
    %v26 = vld [vmem:[%s2] sm:$0xff]
    %v27 = vld [vmem:[%s2 + $0x8] sm:$0xff]
    %v28 = vld [vmem:[%s2 + $0x10] sm:$0xff]
    %v29 = vld [vmem:[%s2 + $0x18] sm:$0xff]
    %v30 = vld [vmem:[%s2 + $0x20] sm:$0xff]
    %v31 = vld [vmem:[%s2 + $0x28] sm:$0xff]
    %v32 = vld [vmem:[%s2 + $0x30] sm:$0xff]
    %v33 = vld [vmem:[%s2 + $0x38] sm:$0xff]
    %v34 = vld [vmem:[%s2 + $0x40] sm:$0x1]
    %v35 = vlaneseq
    %v36 = vshrl.u32 %v35, 7
    %v37 = vsub.s32 0, %v36
    %v38 = vrot.slane %v20, %v37
    %vm39 = vcmask 261120
    %v41 = vsel %vm39, %v15, 0
    %43 = vmatprep.subr.mxu0 0.0
    %44 = vmatpush1.msra.mxu0 %v16
    %45 = vmatprep.subr.mxu0 0.0
    %46 = vmatpush1.msra.mxu0 %v17
    %47 = vmatprep.subr.mxu0 0.0
    %48 = vmatpush1.msra.mxu0 %v18
    %49 = vmatprep.subr.mxu0 0.0
    %50 = vmatpush1.msra.mxu0 %v19
    %51 = vmatprep.subr.mxu0 0.0
    %52 = vmatpush1.msra.mxu0 0.0
    %53 = vmatprep.subr.mxu0 0.0
    %54 = vmatpush1.msra.mxu0 0.0
    %55 = vmatprep.subr.mxu0 0.0
    %56 = vmatpush1.msra.mxu0 0.0
    %57 = vmatprep.subr.mxu0 0.0
    %58 = vmatpush1.msra.mxu0 0.0
    %59 = vmatprep.subr.mxu0 0.0
    %60 = vmatpush1.msra.mxu0 0.0
    %61 = vmatprep.subr.mxu0 0.0
    %62 = vmatpush1.msra.mxu0 0.0
    %63 = vmatprep.subr.mxu0 0.0
    %64 = vmatpush1.msra.mxu0 0.0
    %65 = vmatprep.subr.mxu0 0.0
    %66 = vmatpush1.msra.mxu0 0.0
    %67 = vmatprep.subr.mxu0 0.0
    %68 = vmatpush1.msra.mxu0 0.0
    %69 = vmatprep.subr.mxu0 0.0
    %70 = vmatpush1.msra.mxu0 0.0
    %71 = vmatprep.subr.mxu0 0.0
    %72 = vmatpush1.msra.mxu0 0.0
    %73 = vmatprep.subr.mxu0 0.0
    %74 = vmatpush1.msra.mxu0 0.0
    %75 = vmatprep.subr.mxu0 0.0
    %76 = vmatpush1.msra.mxu0 0.0
    %77 = vmatprep.subr.mxu0 0.0
    %78 = vmatpush1.msra.mxu0 0.0
    %79 = vmatprep.subr.mxu0 0.0
    %80 = vmatpush1.msra.mxu0 0.0
    %81 = vmatprep.subr.mxu0 0.0
    %82 = vmatpush1.msra.mxu0 0.0
    %83 = vmatprep.subr.mxu0 0.0
    %84 = vmatpush1.msra.mxu0 0.0
    %85 = vmatprep.subr.mxu0 0.0
    %86 = vmatpush1.msra.mxu0 0.0
    %87 = vmatprep.subr.mxu0 0.0
    %88 = vmatpush1.msra.mxu0 0.0
    %89 = vmatprep.subr.mxu0 0.0
    %90 = vmatpush1.msra.mxu0 0.0
    %91 = vmatprep.subr.mxu0 0.0
    %92 = vmatpush1.msra.mxu0 0.0
    %93 = vmatprep.subr.mxu0 0.0
    %94 = vmatpush1.msra.mxu0 0.0
    %95 = vmatprep.subr.mxu0 0.0
    %96 = vmatpush1.msra.mxu0 0.0
    %97 = vmatprep.subr.mxu0 0.0
    %98 = vmatpush1.msra.mxu0 0.0
    %99 = vmatprep.subr.mxu0 0.0
    %100 = vmatpush1.msra.mxu0 0.0
    %101 = vmatprep.subr.mxu0 0.0
    %102 = vmatpush1.msra.mxu0 0.0
    %103 = vmatprep.subr.mxu0 0.0
    %104 = vmatpush1.msra.mxu0 0.0
    %105 = vmatprep.subr.mxu0 0.0
    %106 = vmatpush1.msra.mxu0 0.0
    %107 = vmatprep.mubr.f32.mxu0 0.0
    %108 = vmatmul.mubr.f32.gmra.mrb[0].mxu0 %v41
    %v109 = vpop.f32.mrb[0].mxu0
    %v110 = vadd.f32 %v38, %v109
    %v111 = vpop.f32.mrb[0].mxu0
    %112 = vdwg.mxu0
    %v113 = vtanh.pop %v110
    %v114 = vlaneseq
    %v115 = vshrl.u32 %v114, 7
    %v116 = vsub.s32 0, %v115
    %v117 = vrot.slane %v25, %v116
    %v119 = vsel %vm39, %v113, 0
    %121 = vmatprep.subr.mxu0 0.0
    %122 = vmatpush1.msra.mxu0 %v21
    %123 = vmatprep.subr.mxu0 0.0
    %124 = vmatpush1.msra.mxu0 %v22
    %125 = vmatprep.subr.mxu0 0.0
    %126 = vmatpush1.msra.mxu0 %v23
    %127 = vmatprep.subr.mxu0 0.0
    %128 = vmatpush1.msra.mxu0 %v24
    %129 = vmatprep.subr.mxu0 0.0
    %130 = vmatpush1.msra.mxu0 0.0
    %131 = vmatprep.subr.mxu0 0.0
    %132 = vmatpush1.msra.mxu0 0.0
    %133 = vmatprep.subr.mxu0 0.0
    %134 = vmatpush1.msra.mxu0 0.0
    %135 = vmatprep.subr.mxu0 0.0
    %136 = vmatpush1.msra.mxu0 0.0
    %137 = vmatprep.subr.mxu0 0.0
    %138 = vmatpush1.msra.mxu0 0.0
    %139 = vmatprep.subr.mxu0 0.0
    %140 = vmatpush1.msra.mxu0 0.0
    %141 = vmatprep.subr.mxu0 0.0
    %142 = vmatpush1.msra.mxu0 0.0
    %143 = vmatprep.subr.mxu0 0.0
    %144 = vmatpush1.msra.mxu0 0.0
    %145 = vmatprep.subr.mxu0 0.0
    %146 = vmatpush1.msra.mxu0 0.0
    %147 = vmatprep.subr.mxu0 0.0
    %148 = vmatpush1.msra.mxu0 0.0
    %149 = vmatprep.subr.mxu0 0.0
    %150 = vmatpush1.msra.mxu0 0.0
    %151 = vmatprep.subr.mxu0 0.0
    %152 = vmatpush1.msra.mxu0 0.0
    %153 = vmatprep.subr.mxu0 0.0
    %154 = vmatpush1.msra.mxu0 0.0
    %155 = vmatprep.subr.mxu0 0.0
    %156 = vmatpush1.msra.mxu0 0.0
    %157 = vmatprep.subr.mxu0 0.0
    %158 = vmatpush1.msra.mxu0 0.0
    %159 = vmatprep.subr.mxu0 0.0
    %160 = vmatpush1.msra.mxu0 0.0
    %161 = vmatprep.subr.mxu0 0.0
    %162 = vmatpush1.msra.mxu0 0.0
    %163 = vmatprep.subr.mxu0 0.0
    %164 = vmatpush1.msra.mxu0 0.0
    %165 = vmatprep.subr.mxu0 0.0
    %166 = vmatpush1.msra.mxu0 0.0
    %167 = vmatprep.subr.mxu0 0.0
    %168 = vmatpush1.msra.mxu0 0.0
    %169 = vmatprep.subr.mxu0 0.0
    %170 = vmatpush1.msra.mxu0 0.0
    %171 = vmatprep.subr.mxu0 0.0
    %172 = vmatpush1.msra.mxu0 0.0
    %173 = vmatprep.subr.mxu0 0.0
    %174 = vmatpush1.msra.mxu0 0.0
    %175 = vmatprep.subr.mxu0 0.0
    %176 = vmatpush1.msra.mxu0 0.0
    %177 = vmatprep.subr.mxu0 0.0
    %178 = vmatpush1.msra.mxu0 0.0
    %179 = vmatprep.subr.mxu0 0.0
    %180 = vmatpush1.msra.mxu0 0.0
    %181 = vmatprep.subr.mxu0 0.0
    %182 = vmatpush1.msra.mxu0 0.0
    %183 = vmatprep.subr.mxu0 0.0
    %184 = vmatpush1.msra.mxu0 0.0
    %185 = vmatprep.mubr.f32.mxu0 0.0
    %186 = vmatmul.mubr.f32.gmra.mrb[0].mxu0 %v119
    %v187 = vpop.f32.mrb[0].mxu0
    %v188 = vadd.f32 %v117, %v187
    %v189 = vpop.f32.mrb[0].mxu0
    %190 = vdwg.mxu0
    %v191 = vtanh.pop %v188
    %192 = vrot.lane.b32.xlu0 %v113, 96
    %v193 = vpop.permute.xlu0 %192
    %198 = vrot.lane.b32.xlu0 %v21, 96
    %v199 = vpop.permute.xlu0 %198
    %200 = vrot.lane.b32.xlu0 %v22, 96
    %v201 = vpop.permute.xlu0 %200
    %202 = vrot.lane.b32.xlu0 %v23, 96
    %v203 = vpop.permute.xlu0 %202
    %204 = vrot.lane.b32.xlu0 %v24, 96
    %v205 = vpop.permute.xlu0 %204
    %211 = vrot.lane.b32.xlu0 %v117, 96
    %v212 = vpop.permute.xlu0 %211
    %v214 = vsel %vm39, %v193, 0
    %216 = vmatprep.subr.mxu0 0.0
    %217 = vmatpush1.msra.mxu0 %v199
    %218 = vmatprep.subr.mxu0 0.0
    %219 = vmatpush1.msra.mxu0 %v201
    %220 = vmatprep.subr.mxu0 0.0
    %221 = vmatpush1.msra.mxu0 %v203
    %222 = vmatprep.subr.mxu0 0.0
    %223 = vmatpush1.msra.mxu0 %v205
    %224 = vmatprep.subr.mxu0 0.0
    %225 = vmatpush1.msra.mxu0 0.0
    %226 = vmatprep.subr.mxu0 0.0
    %227 = vmatpush1.msra.mxu0 0.0
    %228 = vmatprep.subr.mxu0 0.0
    %229 = vmatpush1.msra.mxu0 0.0
    %230 = vmatprep.subr.mxu0 0.0
    %231 = vmatpush1.msra.mxu0 0.0
    %232 = vmatprep.subr.mxu0 0.0
    %233 = vmatpush1.msra.mxu0 0.0
    %234 = vmatprep.subr.mxu0 0.0
    %235 = vmatpush1.msra.mxu0 0.0
    %236 = vmatprep.subr.mxu0 0.0
    %237 = vmatpush1.msra.mxu0 0.0
    %238 = vmatprep.subr.mxu0 0.0
    %239 = vmatpush1.msra.mxu0 0.0
    %240 = vmatprep.subr.mxu0 0.0
    %241 = vmatpush1.msra.mxu0 0.0
    %242 = vmatprep.subr.mxu0 0.0
    %243 = vmatpush1.msra.mxu0 0.0
    %244 = vmatprep.subr.mxu0 0.0
    %245 = vmatpush1.msra.mxu0 0.0
    %246 = vmatprep.subr.mxu0 0.0
    %247 = vmatpush1.msra.mxu0 0.0
    %248 = vmatprep.subr.mxu0 0.0
    %249 = vmatpush1.msra.mxu0 0.0
    %250 = vmatprep.subr.mxu0 0.0
    %251 = vmatpush1.msra.mxu0 0.0
    %252 = vmatprep.subr.mxu0 0.0
    %253 = vmatpush1.msra.mxu0 0.0
    %254 = vmatprep.subr.mxu0 0.0
    %255 = vmatpush1.msra.mxu0 0.0
    %256 = vmatprep.subr.mxu0 0.0
    %257 = vmatpush1.msra.mxu0 0.0
    %258 = vmatprep.subr.mxu0 0.0
    %259 = vmatpush1.msra.mxu0 0.0
    %260 = vmatprep.subr.mxu0 0.0
    %261 = vmatpush1.msra.mxu0 0.0
    %262 = vmatprep.subr.mxu0 0.0
    %263 = vmatpush1.msra.mxu0 0.0
    %264 = vmatprep.subr.mxu0 0.0
    %265 = vmatpush1.msra.mxu0 0.0
    %266 = vmatprep.subr.mxu0 0.0
    %267 = vmatpush1.msra.mxu0 0.0
    %268 = vmatprep.subr.mxu0 0.0
    %269 = vmatpush1.msra.mxu0 0.0
    %270 = vmatprep.subr.mxu0 0.0
    %271 = vmatpush1.msra.mxu0 0.0
    %272 = vmatprep.subr.mxu0 0.0
    %273 = vmatpush1.msra.mxu0 0.0
    %274 = vmatprep.subr.mxu0 0.0
    %275 = vmatpush1.msra.mxu0 0.0
    %276 = vmatprep.subr.mxu0 0.0
    %277 = vmatpush1.msra.mxu0 0.0
    %278 = vmatprep.subr.mxu0 0.0
    %279 = vmatpush1.msra.mxu0 0.0
    %280 = vmatprep.mubr.f32.mxu0 0.0
    %281 = vmatmul.mubr.f32.gmra.mrb[0].mxu0 %v214
    %v282 = vpop.f32.mrb[0].mxu0
    %v283 = vadd.f32 %v212, %v282
    %v284 = vpop.f32.mrb[0].mxu0
    %285 = vdwg.mxu0
    %v286 = vtanh.pop %v283
    %v288 = vsel %vm39, %v286, 0
    %290 = vmatprep.subr.mxu0 0.0
    %291 = vmatpush1.msra.mxu0 %v30
    %292 = vmatprep.subr.mxu0 0.0
    %293 = vmatpush1.msra.mxu0 %v31
    %294 = vmatprep.subr.mxu0 0.0
    %295 = vmatpush1.msra.mxu0 %v32
    %296 = vmatprep.subr.mxu0 0.0
    %297 = vmatpush1.msra.mxu0 %v33
    %298 = vmatprep.subr.mxu0 0.0
    %299 = vmatpush1.msra.mxu0 0.0
    %300 = vmatprep.subr.mxu0 0.0
    %301 = vmatpush1.msra.mxu0 0.0
    %302 = vmatprep.subr.mxu0 0.0
    %303 = vmatpush1.msra.mxu0 0.0
    %304 = vmatprep.subr.mxu0 0.0
    %305 = vmatpush1.msra.mxu0 0.0
    %306 = vmatprep.subr.mxu0 0.0
    %307 = vmatpush1.msra.mxu0 0.0
    %308 = vmatprep.subr.mxu0 0.0
    %309 = vmatpush1.msra.mxu0 0.0
    %310 = vmatprep.subr.mxu0 0.0
    %311 = vmatpush1.msra.mxu0 0.0
    %312 = vmatprep.subr.mxu0 0.0
    %313 = vmatpush1.msra.mxu0 0.0
    %314 = vmatprep.subr.mxu0 0.0
    %315 = vmatpush1.msra.mxu0 0.0
    %316 = vmatprep.subr.mxu0 0.0
    %317 = vmatpush1.msra.mxu0 0.0
    %318 = vmatprep.subr.mxu0 0.0
    %319 = vmatpush1.msra.mxu0 0.0
    %320 = vmatprep.subr.mxu0 0.0
    %321 = vmatpush1.msra.mxu0 0.0
    %322 = vmatprep.subr.mxu0 0.0
    %323 = vmatpush1.msra.mxu0 0.0
    %324 = vmatprep.subr.mxu0 0.0
    %325 = vmatpush1.msra.mxu0 0.0
    %326 = vmatprep.subr.mxu0 0.0
    %327 = vmatpush1.msra.mxu0 0.0
    %328 = vmatprep.subr.mxu0 0.0
    %329 = vmatpush1.msra.mxu0 0.0
    %330 = vmatprep.subr.mxu0 0.0
    %331 = vmatpush1.msra.mxu0 0.0
    %332 = vmatprep.subr.mxu0 0.0
    %333 = vmatpush1.msra.mxu0 0.0
    %334 = vmatprep.subr.mxu0 0.0
    %335 = vmatpush1.msra.mxu0 0.0
    %336 = vmatprep.subr.mxu0 0.0
    %337 = vmatpush1.msra.mxu0 0.0
    %338 = vmatprep.subr.mxu0 0.0
    %339 = vmatpush1.msra.mxu0 0.0
    %340 = vmatprep.subr.mxu0 0.0
    %341 = vmatpush1.msra.mxu0 0.0
    %342 = vmatprep.subr.mxu0 0.0
    %343 = vmatpush1.msra.mxu0 0.0
    %344 = vmatprep.subr.mxu0 0.0
    %345 = vmatpush1.msra.mxu0 0.0
    %346 = vmatprep.subr.mxu0 0.0
    %347 = vmatpush1.msra.mxu0 0.0
    %348 = vmatprep.subr.mxu0 0.0
    %349 = vmatpush1.msra.mxu0 0.0
    %350 = vmatprep.subr.mxu0 0.0
    %351 = vmatpush1.msra.mxu0 0.0
    %352 = vmatprep.subr.mxu0 0.0
    %353 = vmatpush1.msra.mxu0 0.0
    %354 = vmatprep.mubr.f32.mxu0 0.0
    %355 = vmatmul.mubr.f32.gmra.mrb[0].mxu0 %v288
    %v356 = vpop.f32.mrb[0].mxu0
    %v357 = vadd.f32 0.0, %v356
    %v358 = vpop.f32.mrb[0].mxu0
    %359 = vdwg.mxu0
    %v361 = vsel %vm39, %v191, 0
    %363 = vmatprep.subr.mxu0 0.0
    %364 = vmatpush1.msra.mxu0 %v26
    %365 = vmatprep.subr.mxu0 0.0
    %366 = vmatpush1.msra.mxu0 %v27
    %367 = vmatprep.subr.mxu0 0.0
    %368 = vmatpush1.msra.mxu0 %v28
    %369 = vmatprep.subr.mxu0 0.0
    %370 = vmatpush1.msra.mxu0 %v29
    %371 = vmatprep.subr.mxu0 0.0
    %372 = vmatpush1.msra.mxu0 0.0
    %373 = vmatprep.subr.mxu0 0.0
    %374 = vmatpush1.msra.mxu0 0.0
    %375 = vmatprep.subr.mxu0 0.0
    %376 = vmatpush1.msra.mxu0 0.0
    %377 = vmatprep.subr.mxu0 0.0
    %378 = vmatpush1.msra.mxu0 0.0
    %379 = vmatprep.subr.mxu0 0.0
    %380 = vmatpush1.msra.mxu0 0.0
    %381 = vmatprep.subr.mxu0 0.0
    %382 = vmatpush1.msra.mxu0 0.0
    %383 = vmatprep.subr.mxu0 0.0
    %384 = vmatpush1.msra.mxu0 0.0
    %385 = vmatprep.subr.mxu0 0.0
    %386 = vmatpush1.msra.mxu0 0.0
    %387 = vmatprep.subr.mxu0 0.0
    %388 = vmatpush1.msra.mxu0 0.0
    %389 = vmatprep.subr.mxu0 0.0
    %390 = vmatpush1.msra.mxu0 0.0
    %391 = vmatprep.subr.mxu0 0.0
    %392 = vmatpush1.msra.mxu0 0.0
    %393 = vmatprep.subr.mxu0 0.0
    %394 = vmatpush1.msra.mxu0 0.0
    %395 = vmatprep.subr.mxu0 0.0
    %396 = vmatpush1.msra.mxu0 0.0
    %397 = vmatprep.subr.mxu0 0.0
    %398 = vmatpush1.msra.mxu0 0.0
    %399 = vmatprep.subr.mxu0 0.0
    %400 = vmatpush1.msra.mxu0 0.0
    %401 = vmatprep.subr.mxu0 0.0
    %402 = vmatpush1.msra.mxu0 0.0
    %403 = vmatprep.subr.mxu0 0.0
    %404 = vmatpush1.msra.mxu0 0.0
    %405 = vmatprep.subr.mxu0 0.0
    %406 = vmatpush1.msra.mxu0 0.0
    %407 = vmatprep.subr.mxu0 0.0
    %408 = vmatpush1.msra.mxu0 0.0
    %409 = vmatprep.subr.mxu0 0.0
    %410 = vmatpush1.msra.mxu0 0.0
    %411 = vmatprep.subr.mxu0 0.0
    %412 = vmatpush1.msra.mxu0 0.0
    %413 = vmatprep.subr.mxu0 0.0
    %414 = vmatpush1.msra.mxu0 0.0
    %415 = vmatprep.subr.mxu0 0.0
    %416 = vmatpush1.msra.mxu0 0.0
    %417 = vmatprep.subr.mxu0 0.0
    %418 = vmatpush1.msra.mxu0 0.0
    %419 = vmatprep.subr.mxu0 0.0
    %420 = vmatpush1.msra.mxu0 0.0
    %421 = vmatprep.subr.mxu0 0.0
    %422 = vmatpush1.msra.mxu0 0.0
    %423 = vmatprep.subr.mxu0 0.0
    %424 = vmatpush1.msra.mxu0 0.0
    %425 = vmatprep.subr.mxu0 0.0
    %426 = vmatpush1.msra.mxu0 0.0
    %427 = vmatprep.mubr.f32.mxu0 0.0
    %428 = vmatmul.mubr.f32.gmra.mrb[0].mxu0 %v361
    %v429 = vpop.f32.mrb[0].mxu0
    %v430 = vadd.f32 %v357, %v429
    %v431 = vpop.f32.mrb[0].mxu0
    %432 = vdwg.mxu0
    %v433 = vlaneseq
    %v434 = vshrl.u32 %v433, 7
    %v435 = vsub.s32 0, %v434
    %v436 = vrot.slane %v34, %v435
    %v437 = vadd.f32 %v430, %v436
    %v438 = vlaneseq
    %v439 = vand.u32 %v438, 127
    %vm440 = vcmp.lt.s32.totalorder %v439, 8
    %v441 = vsel %vm440, %v437, -1e+30
    %442 = vmax.xlane.f32.xlu0 %v441
    %v443 = vpop.xlane.xlu0 %442
    %v444 = vsub.f32 %v441, %v443
    %v445 = vmul.f32 %v444, 1.442695
    %v446 = vpow.pop %v445
    %v447 = vsel %vm440, %v446, 0.0
    %448 = vadd.xlane.f32.xlu0 %v447
    %v449 = vpop.xlane.xlu0 %448
    %v450 = vrcp.pop %v449
    %v451 = vmul.f32 %v449, %v450
    %v452 = vsub.f32 2.0, %v451
    %v453 = vmul.f32 %v450, %v452
    %v454 = vmul.f32 %v447, %v453
    %vm455 = vcmp.eq.s32.totalorder %v439, 8
    %v456 = vsel %vm455, %v437, 0.0
    %v457 = vsel %vm440, %v454, %v456
    %458 = vst [vmem:[#allocation2] sm:$0xff] %v457
    // Predicated region
    $region14: #{tpu_custom_call.1} parent=1 // pred_check
      _
    $region15: #{tpu_custom_call.1} parent=1 // pred_check_branch
      %460 = sbr.rel (0) target = $region17
    $region16: #{tpu_custom_call.1} parent=1 // pred_region
      %s462 = ssub.s32 128, 128
      %463 = vsyncadd [#allocation3], %s462
      %s465 = sshll.u32 [#allocation2], 4
      %s466 = int_to_ptr.vmem [resolvable:$true] %s465
      %468 = dma.vmem_to_hbm [thread:$0]  %s466, 128, %s3, [#allocation3]
    $region17: #{tpu_custom_call.1} parent=1 // pred_fallthru
      _
    // Predicated region
    $region18: #{tpu_custom_call.1} parent=1 // pred_check
      _
    $region19: #{tpu_custom_call.1} parent=1 // pred_check_branch
      %470 = sbr.rel (0) target = $region21
    $region20: #{tpu_custom_call.1} parent=1 // pred_region
      %471 = dma.done [#allocation3], 128
    $region21: #{tpu_custom_call.1} parent=1 // pred_fallthru
      _
    %472 = vsyncpa [#allocation3], 1

</llo_original>
